<compile_context>
chip_gen: v5e
topology: v5e:2x2
jax: 0.10.0
libtpu: 0.0.40
codegen_flags: <defaults>
</compile_context>

<pallas_src>
import functools

import jax
import jax.numpy as jnp
from jax.experimental import pallas as pl
from jax.experimental.pallas import tpu as pltpu


def _round_up(x, m):
    return (x + m - 1) // m * m


# ----------------------------------------------------------------------------
# Kernel 1: M-tiled matmul + bias (+ ReLU) for the im2col encoder convolutions.
# Output is computed transposed (Cout, TM) so the HBM store is lane-dense.
# ----------------------------------------------------------------------------

def _matmul_bias_t_kernel(bT_ref, aT_ref, bias_ref, o_ref, *, relu):
    """o (N, TM) = relu?(bT (N,K) @ aT (K,TM) + bias (N,1))."""
    acc = jnp.dot(bT_ref[...], aT_ref[...], preferred_element_type=jnp.float32)
    acc = acc + bias_ref[...]
    if relu:
        acc = jnp.maximum(acc, 0.0)
    o_ref[...] = acc.astype(o_ref.dtype)


def matmul_bias_t(aT, bT, bias, relu=False, tile_m=1024):
    """Returns out (N, M) = relu?(bT @ aT + bias).

    aT: (K, M) bf16 (pre-transposed im2col patches), bT: (N, K), bias: (N,).
    The M axis (pixels) is tiled with a 1-D 'parallel' grid; the result is
    stored transposed so the minor store dim is TM lanes (no masked vst)."""
    K, M = aT.shape
    N, K2 = bT.shape
    assert K == K2
    TM = min(tile_m, _round_up(M, 8))
    Mp = _round_up(M, TM)
    if Mp != M:
        aT = jnp.pad(aT, ((0, 0), (0, Mp - M)))
    bias2 = bias.reshape(N, 1).astype(jnp.float32)

    out = pl.pallas_call(
        functools.partial(_matmul_bias_t_kernel, relu=relu),
        out_shape=jax.ShapeDtypeStruct((N, Mp), jnp.float32),
        grid=(Mp // TM,),
        in_specs=[
            pl.BlockSpec((N, K), lambda i: (0, 0)),
            pl.BlockSpec((K, TM), lambda i: (0, i)),
            pl.BlockSpec((N, 1), lambda i: (0, 0)),
        ],
        out_specs=pl.BlockSpec((N, TM), lambda i: (0, i)),
        compiler_params=pltpu.CompilerParams(
            dimension_semantics=("parallel",)),
    )(bT.astype(jnp.bfloat16), aT.astype(jnp.bfloat16), bias2)
    return out[:, :M] if Mp != M else out


# ----------------------------------------------------------------------------
# Kernel 2: fused decoder level (strip-tiled over H).
#   correlation (cost volume) -> 1x1 distribution conv (MXU) -> softmax ->
#   expectation (MXU).  All intermediates stay in VMEM; layout is channel-major.
# ----------------------------------------------------------------------------

def _fused_decoder_kernel(f1_ref, f2p_ref, w_ref, b_ref, e_ref, *rest,
                          radius, SH, W, with_prob):
    side = 2 * radius + 1
    D = side * side
    if with_prob:
        prob_ref, vect_ref, cost_ref = rest
    else:
        vect_ref, cost_ref = rest

    hi = pl.program_id(1)
    row0 = pl.multiple_of(hi * SH, SH)          # strip start row in f2p (padded)

    f1 = f1_ref[0].astype(jnp.float32)          # (C, SH, W), f32 accumulation
    C = f1.shape[0]
    inv_c = 1.0 / float(C)

    # --- correlation: one lane-dense (SH, W) plane per displacement ----------
    # TODO(synk): dx shifts could use pltpu.roll on a resident (C, SH, Wp) slab
    # to move the lane shift onto the XLU instead of unaligned lane slices.
    di = 0
    for dy in range(side):                      # displacement (dy - r) slow
        for dx in range(side):                  # displacement (dx - r) fast
            f2s = f2p_ref[0, :, pl.ds(row0 + dy, SH), dx:dx + W]
            cost_ref[di] = jnp.sum(f1 * f2s.astype(jnp.float32), axis=0) * inv_c
            di += 1

    # --- 1x1 decoder conv on the distribution axis: single MXU matmul --------
    cost2 = cost_ref[...].reshape(D, SH * W)                      # (D, SH*W)
    logits = jnp.dot(w_ref[...], cost2,
                     preferred_element_type=jnp.float32) + b_ref[...]

    # --- softmax over the distribution (sublane) axis -------------------------
    m = jnp.max(logits, axis=0, keepdims=True)                    # (1, SH*W)
    ex = jnp.exp(logits - m)                                      # (D, SH*W)
    denom = jnp.sum(ex, axis=0, keepdims=True)
    inv = pl.reciprocal(denom, approx=True)
    inv = inv * (2.0 - denom * inv)             # one Newton step -> ~f32 accuracy

    # --- expectation of the displacement grid -> (u, v): tiny MXU matmul -----
    uv = jnp.dot(e_ref[...], ex, preferred_element_type=jnp.float32) * inv
    vect_ref[0] = uv                                              # (2, SH*W)
    if with_prob:
        prob_ref[0] = ex * inv                                    # (D, SH*W)


def _pick_strip(H, W, target_rows=64):
    """Largest strip height <= target_rows that divides H and keeps the
    (SH, W) / (SH*W) block dims (8,128)-legal; falls back to the full height."""
    if H <= target_rows:
        return H
    best = H
    s = 8
    while s <= target_rows:
        if H % s == 0 and (s * W) % 128 == 0:
            best = s
        s += 8
    return best


def fused_decoder(f1_cm, f2_cm, w, b, radius, with_prob=True, strip_rows=64):
    """Fused correlation + 1x1 conv + softmax + expectation, strip-tiled over H.

    f1_cm / f2_cm are channel-major (B, C, H, W).  Returns (prob, vect) with
    prob = (B, D, H, W) (or None when with_prob=False) and vect = (B, 2, H, W),
    both already NCHW."""
    B, C, H, W = f1_cm.shape
    side = 2 * radius + 1
    D = side * side
    Hp, Wp = H + 2 * radius, W + 2 * radius
    SH = _pick_strip(H, W, strip_rows)
    n_strips = H // SH

    f1_bf = f1_cm.astype(jnp.bfloat16)
    f2p = jnp.pad(f2_cm.astype(jnp.bfloat16),
                  ((0, 0), (0, 0), (radius, radius), (radius, radius)))
    w2 = w.reshape(D, D).astype(jnp.float32)
    b2 = b.reshape(D, 1).astype(jnp.float32)
    dxs = [float(d % side - radius) for d in range(D)]
    dys = [float(d // side - radius) for d in range(D)]
    e2 = jnp.array([dxs, dys], dtype=jnp.float32)                 # (2, D)

    # TODO(synk): for very large feature maps the whole padded f2 per batch may
    # not fit VMEM; strip-tile f2 with a 2r halo via manual DMA in that case.
    in_specs = [
        pl.BlockSpec((1, C, SH, W), lambda bi, hi: (bi, 0, hi, 0)),
        pl.BlockSpec((1, C, Hp, Wp), lambda bi, hi: (bi, 0, 0, 0)),
        pl.BlockSpec((D, D), lambda bi, hi: (0, 0)),
        pl.BlockSpec((D, 1), lambda bi, hi: (0, 0)),
        pl.BlockSpec((2, D), lambda bi, hi: (0, 0)),
    ]
    vect_shape = jax.ShapeDtypeStruct((B, 2, H * W), jnp.float32)
    vect_spec = pl.BlockSpec((1, 2, SH * W), lambda bi, hi: (bi, 0, hi))
    if with_prob:
        out_shape = (jax.ShapeDtypeStruct((B, D, H * W), jnp.float32), vect_shape)
        out_specs = (pl.BlockSpec((1, D, SH * W), lambda bi, hi: (bi, 0, hi)),
                     vect_spec)
    else:
        out_shape = vect_shape
        out_specs = vect_spec

    kernel = functools.partial(_fused_decoder_kernel, radius=radius,
                               SH=SH, W=W, with_prob=with_prob)
    outs = pl.pallas_call(
        kernel,
        out_shape=out_shape,
        grid=(B, n_strips),
        in_specs=in_specs,
        out_specs=out_specs,
        scratch_shapes=[pltpu.VMEM((D, SH, W), jnp.float32)],
        compiler_params=pltpu.CompilerParams(
            dimension_semantics=("parallel", "parallel")),
    )(f1_bf, f2p, w2, b2, e2)

    if with_prob:
        prob_flat, vect_flat = outs
        prob = prob_flat.reshape(B, D, H, W)
    else:
        prob, vect_flat = None, outs
    vect = vect_flat.reshape(B, 2, H, W)
    return prob, vect


# ----------------------------------------------------------------------------
# Glue (im2col, layout transposes) — plain JAX
# ----------------------------------------------------------------------------

def conv3x3_s2(x_nhwc, w_flat, bias, relu=True):
    """3x3 / stride 2 / pad 1 conv via bf16 im2col (pre-transposed patches) +
    lane-dense Pallas matmul.  Returns (Cout, B, Ho, Wo) f32.
    w_flat: [9*Cin, Cout] with K ordered (ky, kx, cin)."""
    # TODO(synk): fully fuse the 9 im2col taps into the Pallas kernel (per-tap
    # (C, Cout) weight slices + strided in-kernel loads) to remove the remaining
    # HBM read amplification of the materialized patch matrix.
    x = x_nhwc.astype(jnp.bfloat16)
    B, H, W, C = x.shape
    k, s, pad = 3, 2, 1
    Ho = (H + 2 * pad - k) // s + 1
    Wo = (W + 2 * pad - k) // s + 1
    xp = jnp.pad(x, ((0, 0), (pad, pad), (pad, pad), (0, 0)))
    rows = []
    for ky in range(k):
        for kx in range(k):
            sl = xp[:, ky:ky + s * (Ho - 1) + 1:s,
                    kx:kx + s * (Wo - 1) + 1:s, :]          # (B, Ho, Wo, C)
            rows.append(jnp.transpose(sl, (3, 0, 1, 2)).reshape(C, B * Ho * Wo))
    aT = jnp.concatenate(rows, axis=0)                      # (9C, B*Ho*Wo) bf16
    bT = jnp.transpose(w_flat)                              # (Cout, 9C)
    out = matmul_bias_t(aT, bT, bias, relu=relu)            # (Cout, B*Ho*Wo)
    return out.reshape(w_flat.shape[1], B, Ho, Wo)


def nchw_to_nhwc(x):
    return jnp.transpose(x, (0, 2, 3, 1))


# ----------------------------------------------------------------------------
# HD3Model (Pallas-backed, synthetic deterministic parameters)
# ----------------------------------------------------------------------------

class HD3ModelPallas:
    def __init__(self, task="flow", encoder="dlaup", decoder="hda",
                 corr_range=(2, 2), context=False, seed=0):
        self.ds = 6
        self.task = task
        self.encoder = encoder
        self.decoder = decoder
        self.corr_range = list(corr_range)
        self.context = context

        key = jax.random.PRNGKey(seed)
        ks = jax.random.split(key, 2 + len(self.corr_range))
        c0, c1, c2 = 3, 8, 16
        # Shared two-level encoder.
        self.enc1_w = 0.1 * jax.random.normal(ks[0], (9 * c0, c1), jnp.float32)
        self.enc1_b = jnp.zeros((c1,), jnp.float32)
        self.enc2_w = 0.1 * jax.random.normal(ks[1], (9 * c1, c2), jnp.float32)
        self.enc2_b = jnp.zeros((c2,), jnp.float32)
        # Per-level 1x1 decoder conv on the cost volume -> distribution logits.
        self.dec_w, self.dec_b = [], []
        for i, r in enumerate(self.corr_range):
            D = (2 * r + 1) ** 2
            self.dec_w.append(
                0.1 * jax.random.normal(ks[2 + i], (D, D), jnp.float32))
            self.dec_b.append(jnp.zeros((D,), jnp.float32))

    # --- hd3net: pyramid encoder + fused correlation/distribution decoder ----
    def hd3net(self, x_nchw, need_prob=True):
        x = nchw_to_nhwc(x_nchw)                # [B, H, W, 6]
        img1, img2 = x[..., :3], x[..., 3:]

        # (Cout, B, Ho, Wo) channel-leading conv outputs.
        f1_l1_cb = conv3x3_s2(img1, self.enc1_w, self.enc1_b)   # 1/2 res
        f2_l1_cb = conv3x3_s2(img2, self.enc1_w, self.enc1_b)
        f1_l1_hwc = jnp.transpose(f1_l1_cb, (1, 2, 3, 0)).astype(jnp.bfloat16)
        f2_l1_hwc = jnp.transpose(f2_l1_cb, (1, 2, 3, 0)).astype(jnp.bfloat16)
        f1_l2_cb = conv3x3_s2(f1_l1_hwc, self.enc2_w, self.enc2_b)  # 1/4 res
        f2_l2_cb = conv3x3_s2(f2_l1_hwc, self.enc2_w, self.enc2_b)

        # NCHW (channel-major) features for the decoder / feats outputs.
        f1_l1_cm = jnp.transpose(f1_l1_cb, (1, 0, 2, 3))
        f2_l1_cm = jnp.transpose(f2_l1_cb, (1, 0, 2, 3))
        f1_l2_cm = jnp.transpose(f1_l2_cb, (1, 0, 2, 3))
        f2_l2_cm = jnp.transpose(f2_l2_cb, (1, 0, 2, 3))

        # TODO(synk): full HD3Net does coarse-to-fine warping / residual
        # refinement between pyramid levels; levels are decoded independently here.
        pyramid = [(f1_l2_cm, f2_l2_cm), (f1_l1_cm, f2_l1_cm)]   # coarse -> fine
        ms_prob, ms_vect = [], []
        for lvl, (fa, fb) in enumerate(pyramid):
            r = self.corr_range[lvl]
            prob, vect = fused_decoder(fa, fb, self.dec_w[lvl], self.dec_b[lvl],
                                       r, with_prob=need_prob)
            ms_prob.append(prob)     # NCHW (B, D, Hf, Wf) or None
            ms_vect.append(vect)     # NCHW (B, 2, Hf, Wf)

        feats = [f1_l1_cm, f1_l2_cm]
        return ms_prob, ms_vect, feats

    # --- forward: mirrors HD3Model.forward -----------------------------------
    def forward(self, img_list, label_list=None, get_vect=True, get_prob=False,
                get_loss=False, get_epe=False, get_vis=False, get_feats=False):
        result = {}
        x = jnp.concatenate(img_list, axis=1)    # torch.cat(img_list, 1) (NCHW)
        need_prob = get_prob or get_loss or get_vis
        ms_prob, ms_vect, feats = self.hd3net(x, need_prob=need_prob)
        if get_vect:
            result['vect'] = ms_vect[-1]
        if get_prob:
            result['prob'] = ms_prob[-1]
        if get_loss:
            # TODO(synk): LossCalculator (multi-scale classification loss) is not
            # defined in the reference snippet.
            pass
        if get_epe:
            # TODO(synk): EndPointError needs ground-truth labels; not defined in
            # the reference snippet.
            pass
        if get_vis:
            # TODO(synk): get_visualization is plotting glue with no Pallas equivalent.
            pass
        if get_feats:
            result['feats'] = feats
        return result


# ----------------------------------------------------------------------------
if __name__ == "__main__":
    key = jax.random.PRNGKey(0)
    k1, k2 = jax.random.split(key)
    B, C, H, W = 2, 3, 16, 16
    img1 = jax.random.normal(k1, (B, C, H, W), dtype=jnp.float32)
    img2 = jax.random.normal(k2, (B, C, H, W), dtype=jnp.float32)

    model = HD3ModelPallas(task="flow", encoder="dlaup", decoder="hda",
                           corr_range=(2, 2), context=False, seed=0)
    result = model.forward([img1, img2], get_vect=True, get_prob=True,
                           get_feats=True)
    result = jax.block_until_ready(result)

    vect = result['vect']
    prob = result['prob']
    assert vect.shape == (B, 2, H // 2, W // 2), vect.shape
    assert prob.shape == (B, 25, H // 2, W // 2), prob.shape
    assert bool(jnp.all(jnp.isfinite(vect)))
    # Probabilities along the distribution axis must sum to 1.
    assert bool(jnp.allclose(jnp.sum(prob, axis=1), 1.0, atol=1e-5))
    print("KERNEL_OK")
</pallas_src>

<mosaic_0001>
module attributes {stable_mosaic.version = 11 : i64} {
  func.func @_matmul_bias_t_kernel(%arg0: i32, %arg1: memref<8x27xbf16, #tpu.memory_space<vmem>>, %arg2: memref<27x128xbf16, #tpu.memory_space<vmem>>, %arg3: memref<8x1xf32, #tpu.memory_space<vmem>>, %arg4: memref<8x128xf32, #tpu.memory_space<vmem>>) attributes {dimension_semantics = [#tpu.dimension_semantics<parallel>], iteration_bounds = array<i64: 1>, scalar_prefetch = 0 : i64, scratch_operands = 0 : i64, tpu.core_type = #tpu.core_type<tc>, window_params = [{pipeline_mode = #tpu.pipeline_mode<synchronous>, transform_indices = @transform_0, window_bounds = array<i64: 8, 27>}, {transform_indices = @transform_1, window_bounds = array<i64: 27, 128>}, {pipeline_mode = #tpu.pipeline_mode<synchronous>, transform_indices = @transform_2, window_bounds = array<i64: 8, 1>}, {transform_indices = @transform_3, window_bounds = array<i64: 8, 128>}]} {
    %c0 = arith.constant 0 : index
    %c0_0 = arith.constant 0 : index
    %0 = vector.load %arg1[%c0, %c0_0] : memref<8x27xbf16, #tpu.memory_space<vmem>>, vector<8x27xbf16>
    %c0_1 = arith.constant 0 : index
    %c0_2 = arith.constant 0 : index
    %1 = vector.load %arg2[%c0_1, %c0_2] : memref<27x128xbf16, #tpu.memory_space<vmem>>, vector<27x128xbf16>
    %cst = arith.constant dense<0.000000e+00> : vector<8x128xf32>
    %2 = tpu.matmul %0, %1, %cst {dimension_numbers = #tpu.dot_dimension_numbers<[1], [0], [0], [1], [0, 0, 1, 1], [], []>} : vector<8x27xbf16>, vector<27x128xbf16>, vector<8x128xf32> -> vector<8x128xf32>
    %c0_3 = arith.constant 0 : index
    %c0_4 = arith.constant 0 : index
    %3 = vector.load %arg3[%c0_3, %c0_4] : memref<8x1xf32, #tpu.memory_space<vmem>>, vector<8x1xf32>
    %4 = vector.broadcast %3 : vector<8x1xf32> to vector<8x128xf32>
    %5 = arith.addf %2, %4 : vector<8x128xf32>
    %cst_5 = arith.constant 0.000000e+00 : f32
    %6 = vector.broadcast %cst_5 : f32 to vector<8x128xf32>
    %7 = arith.maximumf %5, %6 : vector<8x128xf32>
    %c0_6 = arith.constant 0 : index
    %c0_7 = arith.constant 0 : index
    %8 = vector.load %arg4[%c0_6, %c0_7] : memref<8x128xf32, #tpu.memory_space<vmem>>, vector<8x128xf32>
    tpu.vector_store %arg4[%c0_6, %c0_7], %7 {strides = array<i32>} : memref<8x128xf32, #tpu.memory_space<vmem>>, vector<8x128xf32>,
    return
  }
  func.func @transform_0(%arg0: i32) -> (i32, i32) {
    %c0_i32 = arith.constant 0 : i32
    %c0_i32_0 = arith.constant 0 : i32
    %c0_i32_1 = arith.constant 0 : i32
    return %c0_i32, %c0_i32_0 : i32, i32
  }
  func.func @transform_1(%arg0: i32) -> (i32, i32) {
    %c0_i32 = arith.constant 0 : i32
    %c0_i32_0 = arith.constant 0 : i32
    return %c0_i32, %arg0 : i32, i32
  }
  func.func @transform_2(%arg0: i32) -> (i32, i32) {
    %c0_i32 = arith.constant 0 : i32
    %c0_i32_0 = arith.constant 0 : i32
    %c0_i32_1 = arith.constant 0 : i32
    return %c0_i32, %c0_i32_0 : i32, i32
  }
  func.func @transform_3(%arg0: i32) -> (i32, i32) {
    %c0_i32 = arith.constant 0 : i32
    %c0_i32_0 = arith.constant 0 : i32
    return %c0_i32, %arg0 : i32, i32
  }
}

</mosaic_0001>

<llo_original>
// kernel: tpu_custom_call.1
$region0: #{tpu_custom_call.1}
  #allocation0 [shape = 'u32[]', space=smem, size = 0x4, offset = 0x4, fixed_abs, tag = 'smem constant byte address 0x4 - core index']
  #allocation1 [shape = 'u32[72,128]{1,0:T(1,128)}', space=vmem, size = 0x9000, scoped, tag = 'internal scratch']
  %s0 = inlined_call_operand.vmem [shape: bf16[8,27], index: 0, kind: input, shape index: {}]
  %s1 = inlined_call_operand.hbm [shape: bf16[27,128], index: 1, kind: input, shape index: {}]
  %s2 = inlined_call_operand.vmem [shape: f32[8,1], index: 2, kind: input, shape index: {}]
  %s3 = inlined_call_operand.hbm [shape: f32[8,128], index: 3, kind: output, shape index: {}]
  %s4 = sld [smem:[#allocation0]]
  $region26: #{tpu_custom_call.1} parent=0
    _
  %s6 = ssub.s32 1, %s4
  %s7 = scalar_select 0, %s6, %s4
  $region1: #{tpu_custom_call.1} parent=0
    #allocation2 [shape = 'u8[8192]{0}', space=vmem, size = 0x2000, scoped, tag = 'input window, operand 1, single buffered']
    #allocation3 [shape = 's32[1]{0}', space=sflag, size = 0x4, scoped, tag = 'scoped memory for tpu_custom_call.1']
    #allocation4 [shape = 's32[1]{0}', space=sflag, size = 0x4, scoped, tag = 'scoped memory for tpu_custom_call.1']
    #allocation5 [shape = 'u8[4096]{0}', space=vmem, size = 0x1000, scoped, tag = 'output window, operand 0, single buffered']
    %8 = vsyncpa [#allocation3], 0
    %9 = vsyncpa [#allocation4], 0
    // Predicated region
    $region2: #{tpu_custom_call.1} parent=1 // pred_check
      _
    $region3: #{tpu_custom_call.1} parent=1 // pred_check_branch
      %11 = sbr.rel (0) target = $region5
    $region4: #{tpu_custom_call.1} parent=1 // pred_region
      _
    $region5: #{tpu_custom_call.1} parent=1 // pred_fallthru
      _
    // Predicated region
    $region6: #{tpu_custom_call.1} parent=1 // pred_check
      _
    $region7: #{tpu_custom_call.1} parent=1 // pred_check_branch
      %13 = sbr.rel (0) target = $region9
    $region8: #{tpu_custom_call.1} parent=1 // pred_region
      %15 = vsyncadd [#allocation3], 0
      %s16 = sshll.u32 %s1, 4
      %s17 = int_to_ptr.hbm [resolvable:$true] %s16
      %s18 = sshll.u32 [#allocation2], 4
      %s19 = int_to_ptr.vmem [resolvable:$true] %s18
      %24 = dma.hbm_to_vmem [thread:$0]  %s17, 256, %s19, [#allocation3], 64, 64, 4
    $region9: #{tpu_custom_call.1} parent=1 // pred_fallthru
      _
    // Predicated region
    $region10: #{tpu_custom_call.1} parent=1 // pred_check
      _
    $region11: #{tpu_custom_call.1} parent=1 // pred_check_branch
      %26 = sbr.rel (0) target = $region13
    $region12: #{tpu_custom_call.1} parent=1 // pred_region
      _
    $region13: #{tpu_custom_call.1} parent=1 // pred_fallthru
      _
    // Predicated region
    $region14: #{tpu_custom_call.1} parent=1 // pred_check
      _
    $region15: #{tpu_custom_call.1} parent=1 // pred_check_branch
      %28 = sbr.rel (0) target = $region17
    $region16: #{tpu_custom_call.1} parent=1 // pred_region
      %30 = dma.done [#allocation3], 256
    $region17: #{tpu_custom_call.1} parent=1 // pred_fallthru
      _
    %v32 = vld [vmem:[%s0] sm:$0xf]
    %v33 = vld [vmem:[#allocation2] sm:$0xf]
    %v34 = vld [vmem:[#allocation2 + $0x4] sm:$0xf]
    %v35 = vld [vmem:[#allocation2 + $0x8] sm:$0xf]
    %v36 = vld [vmem:[#allocation2 + $0xc] sm:$0x3]
    %v37 = vld [vmem:[%s2] sm:$0xff]
    %39 = vset.pattern.permute.xlu0 0
    %40 = vperm.xlu0 %39, %v37
    %v41 = vpop.permute.xlu0 %40
    %v47 = vunpack.c.l.b16 %v33
    %v48 = vunpack.c.l.b16 %v34
    %v49 = vunpack.c.l.b16 %v35
    %v50 = vunpack.c.l.b16 %v36
    %v51 = vpack.c.b16 %v48, %v47
    %v52 = vpack.c.b16 %v50, %v49
    %vm54 = vcmask 220160
    %v56 = vsel %vm54, %v32, 0
    %vm58 = vcmask 1044480
    %vm59 = vcmask 1045504
    %v60 = vsel %vm58, 4294967295, 65535
    %v61 = vsel %vm59, %v60, 0
    %v63 = vand.u32 %v52, %v61
    %65 = vmatpush.bf16.msra.mxu0 0
    %66 = vmatpush.bf16.msra.mxu0 0
    %67 = vmatpush.bf16.msra.mxu0 0
    %68 = vmatpush.bf16.msra.mxu0 0
    %69 = vmatpush.bf16.msra.mxu0 0
    %70 = vmatpush.bf16.msra.mxu0 0
    %71 = vmatpush.bf16.msra.mxu0 %v63
    %72 = vmatpush.bf16.msra.mxu0 %v51
    %73 = vmatmul.bf16.gmra.mxu0 %v56
    %v74 = vpop.f32.mrf.mxu0
    %v75 = vadd.f32 %v41, %v74
    %v76 = vpop.f32.mrf.mxu0
    %77 = vdwg.mxu0
    %v78 = vmax.f32 %v75, 0.0
    %79 = vst [vmem:[#allocation5] sm:$0xff] %v78
    // Predicated region
    $region18: #{tpu_custom_call.1} parent=1 // pred_check
      _
    $region19: #{tpu_custom_call.1} parent=1 // pred_check_branch
      %81 = sbr.rel (0) target = $region21
    $region20: #{tpu_custom_call.1} parent=1 // pred_region
      %83 = vsyncadd [#allocation4], 0
      %s85 = sshll.u32 [#allocation5], 4
      %s86 = int_to_ptr.vmem [resolvable:$true] %s85
      %s87 = sshll.u32 %s3, 4
      %s88 = int_to_ptr.hbm [resolvable:$true] %s87
      %90 = dma.vmem_to_hbm [thread:$0]  %s86, 128, %s88, [#allocation4]
    $region21: #{tpu_custom_call.1} parent=1 // pred_fallthru
      _
    // Predicated region
    $region22: #{tpu_custom_call.1} parent=1 // pred_check
      _
    $region23: #{tpu_custom_call.1} parent=1 // pred_check_branch
      %92 = sbr.rel (0) target = $region25
    $region24: #{tpu_custom_call.1} parent=1 // pred_region
      %94 = dma.done [#allocation4], 128
    $region25: #{tpu_custom_call.1} parent=1 // pred_fallthru
      _
    %95 = vsyncpa [#allocation3], 1
    %96 = vsyncpa [#allocation4], 1

</llo_original>
